<compile_context>
chip_gen: v7x
topology: tpu7x:2x2x1
jax: 0.10.0
libtpu: 0.0.40
codegen_flags: <defaults>
</compile_context>

<pallas_src>
import jax
import jax.numpy as jnp
from jax.experimental import pallas as pl
from jax.experimental.pallas import tpu as pltpu


def _round_up(x, m):
    return (x + m - 1) // m * m


def _cdiv(a, b):
    return (a + b - 1) // b


def _mlpconv_kernel(x_ref, *refs):
    """One (batch, point-tile) step of the fused 1x1-conv MLP.

    x_ref  : (C0, tn)  input tile in its stored dtype (f32); cast to bf16 here
    refs   : (w1, b1, w2, b2, ..., wL, bL, out_ref)
             w_i: (C_i, C_{i-1}) bf16   b_i: (C_i, 1) f32
    out_ref: (C_L, tn)
    """
    out_ref = refs[-1]
    params = refs[:-1]
    n_layers = len(params) // 2

    # In-kernel cast: avoids a separate XLA bf16-cast pass over the input in HBM.
    h = x_ref[...].astype(jnp.bfloat16)                  # (C_in, tn)
    for i in range(n_layers):
        w = params[2 * i][...]                           # (C_out, C_in) bf16
        b = params[2 * i + 1][...]                       # (C_out, 1)    f32
        # MXU matmul with f32 accumulation; bias add stays f32 on the VPU.
        h = jnp.dot(w, h, preferred_element_type=jnp.float32) + b
        if i < n_layers - 1:                             # hidden layers: ReLU
            h = jnp.maximum(h, 0.0).astype(jnp.bfloat16)
    out_ref[...] = h.astype(out_ref.dtype)


def mlpconv_forward(x_ncl, weights, biases, *, tn=4096, out_dtype=jnp.float32):
    """Fused MLPConv forward on TPU via Pallas, on the native (B, C, N) layout.

    x_ncl    : (B, C0, N)   PyTorch-style Conv1d input
    weights  : list of (C_out, C_in) arrays (Conv1d weight with k=1 squeezed)
    biases   : list of (C_out,) arrays
    tn       : points per grid step (multiple of 128)
    out_dtype: output dtype (f32 matches PyTorch; bf16 halves the output stream)
    """
    assert tn % 128 == 0, "tn must be a multiple of 128 for lane-dense tiles"
    B, C0, N = x_ncl.shape

    # Point-tile selection. No padding / reshaping in the wrapper:
    #  * N > tn  : lane-dense 128-multiple tile; Pallas handles the partial tail.
    #  * N <= tn : full-dim block (always layout-legal). If B == 1, split so the
    #              2-D "parallel" grid still has >=2 steps (v7x two TensorCores).
    if N > tn:
        tn_eff = tn
    else:
        tn_eff = N
        if B == 1 and N >= 256:
            half = _round_up(_cdiv(N, 2), 128)
            if half < N:
                tn_eff = half
    grid = (B, _cdiv(N, tn_eff))

    wts = [jnp.asarray(w, jnp.bfloat16) for w in weights]           # (C_out, C_in)
    bss = [jnp.asarray(b, jnp.float32).reshape(-1, 1) for b in biases]  # (C_out, 1)
    c_out = wts[-1].shape[0]

    # Input: batch dim squeezed, channels on sublanes, points on lanes.
    in_specs = [pl.BlockSpec((None, C0, tn_eff), lambda b, i: (b, 0, i))]
    params = []
    for w, bvec in zip(wts, bss):
        # Tiny parameter stack; constant index_map -> fetched once, reused.
        in_specs.append(pl.BlockSpec(w.shape, lambda b, i: (0, 0)))
        in_specs.append(pl.BlockSpec(bvec.shape, lambda b, i: (0, 0)))
        params += [w, bvec]

    out = pl.pallas_call(
        _mlpconv_kernel,
        out_shape=jax.ShapeDtypeStruct((B, c_out, N), out_dtype),
        grid_spec=pltpu.PrefetchScalarGridSpec(
            num_scalar_prefetch=0,
            grid=grid,
            in_specs=in_specs,
            out_specs=pl.BlockSpec((None, c_out, tn_eff), lambda b, i: (b, 0, i)),
        ),
        compiler_params=pltpu.CompilerParams(
            dimension_semantics=("parallel", "parallel"),
            vmem_limit_bytes=32 * 1024 * 1024),
    )(x_ncl, *params)
    return out                                            # (B, C_out, N)


def init_params(dims, key):
    """Deterministic init mimicking PyTorch Conv1d default (U[-1/sqrt(fan_in), ...])."""
    weights, biases = [], []
    for i in range(len(dims) - 1):
        key, kw, kb = jax.random.split(key, 3)
        fan_in = dims[i]
        bound = 1.0 / (fan_in ** 0.5)
        weights.append(
            jax.random.uniform(kw, (dims[i + 1], dims[i]), jnp.float32, -bound, bound))
        biases.append(
            jax.random.uniform(kb, (dims[i + 1],), jnp.float32, -bound, bound))
    return weights, biases


def ref_forward(x_ncl, weights, biases):
    """Pure-JAX reference of the PyTorch forward (matched bf16-in / f32-acc)."""
    h = jnp.transpose(x_ncl, (0, 2, 1))                   # (B, N, C)
    n = len(weights)
    for i, (w, b) in enumerate(zip(weights, biases)):
        h = jnp.dot(h.astype(jnp.bfloat16),
                    jnp.transpose(w).astype(jnp.bfloat16),
                    preferred_element_type=jnp.float32) + b
        if i < n - 1:
            h = jnp.maximum(h, 0.0)
    return jnp.transpose(h, (0, 2, 1)).astype(jnp.float32)


if __name__ == "__main__":
    # dims as in MLPConv(dims): two hidden conv1d(k=1)+ReLU layers, then output conv1d.
    dims = [4, 32, 64, 16]
    key = jax.random.PRNGKey(0)

    # Small case: (batch=2, channels=4, length=16) -> one full-dim point block per batch.
    B, N = 2, 16
    key, kx = jax.random.split(key)
    x = jax.random.normal(kx, (B, dims[0], N), jnp.float32)
    weights, biases = init_params(dims, key)

    out = jax.block_until_ready(mlpconv_forward(x, weights, biases))
    ref = ref_forward(x, weights, biases)
    assert out.shape == (B, dims[-1], N), out.shape
    assert jnp.allclose(out, ref, rtol=1e-2, atol=1e-2), "mismatch vs reference"

    # Longer case exercising the multi-tile grid and the partial (non-divisible) tail.
    key, kx2 = jax.random.split(key)
    x2 = jax.random.normal(kx2, (2, dims[0], 272), jnp.float32)   # 272 = 256 + 16
    out2 = jax.block_until_ready(mlpconv_forward(x2, weights, biases, tn=256))
    ref2 = ref_forward(x2, weights, biases)
    assert out2.shape == (2, dims[-1], 272), out2.shape
    assert jnp.allclose(out2, ref2, rtol=1e-2, atol=1e-2), "mismatch vs reference (tiled)"

    print("KERNEL_OK")
</pallas_src>

<mosaic_0001>
module attributes {stable_mosaic.version = 11 : i64} {
  func.func @_mlpconv_kernel(%arg0: i32, %arg1: i32, %arg2: memref<1x4x16xf32, #tpu.memory_space<vmem>>, %arg3: memref<32x4xbf16, #tpu.memory_space<vmem>>, %arg4: memref<32x1xf32, #tpu.memory_space<vmem>>, %arg5: memref<64x32xbf16, #tpu.memory_space<vmem>>, %arg6: memref<64x1xf32, #tpu.memory_space<vmem>>, %arg7: memref<16x64xbf16, #tpu.memory_space<vmem>>, %arg8: memref<16x1xf32, #tpu.memory_space<vmem>>, %arg9: memref<1x16x16xf32, #tpu.memory_space<vmem>>) attributes {dimension_semantics = [#tpu.dimension_semantics<parallel>, #tpu.dimension_semantics<parallel>], iteration_bounds = array<i64: 2, 1>, scalar_prefetch = 0 : i64, scratch_operands = 0 : i64, tpu.core_type = #tpu.core_type<tc>, window_params = [{transform_indices = @transform_0, window_bounds = array<i64: 1, 4, 16>}, {pipeline_mode = #tpu.pipeline_mode<synchronous>, transform_indices = @transform_1, window_bounds = array<i64: 32, 4>}, {pipeline_mode = #tpu.pipeline_mode<synchronous>, transform_indices = @transform_2, window_bounds = array<i64: 32, 1>}, {pipeline_mode = #tpu.pipeline_mode<synchronous>, transform_indices = @transform_3, window_bounds = array<i64: 64, 32>}, {pipeline_mode = #tpu.pipeline_mode<synchronous>, transform_indices = @transform_4, window_bounds = array<i64: 64, 1>}, {pipeline_mode = #tpu.pipeline_mode<synchronous>, transform_indices = @transform_5, window_bounds = array<i64: 16, 64>}, {pipeline_mode = #tpu.pipeline_mode<synchronous>, transform_indices = @transform_6, window_bounds = array<i64: 16, 1>}, {transform_indices = @transform_7, window_bounds = array<i64: 1, 16, 16>}]} {
    %c0 = arith.constant 0 : index
    %c0_0 = arith.constant 0 : index
    %c0_1 = arith.constant 0 : index
    %0 = vector.load %arg2[%c0, %c0_0, %c0_1] : memref<1x4x16xf32, #tpu.memory_space<vmem>>, vector<1x4x16xf32>
    %1 = vector.shape_cast %0 : vector<1x4x16xf32> to vector<4x16xf32>
    %2 = arith.truncf %1 : vector<4x16xf32> to vector<4x16xbf16>
    %c0_2 = arith.constant 0 : index
    %c0_3 = arith.constant 0 : index
    %3 = vector.load %arg3[%c0_2, %c0_3] : memref<32x4xbf16, #tpu.memory_space<vmem>>, vector<32x4xbf16>
    %c0_4 = arith.constant 0 : index
    %c0_5 = arith.constant 0 : index
    %4 = vector.load %arg4[%c0_4, %c0_5] : memref<32x1xf32, #tpu.memory_space<vmem>>, vector<32x1xf32>
    %cst = arith.constant dense<0.000000e+00> : vector<32x16xf32>
    %5 = tpu.matmul %3, %2, %cst {dimension_numbers = #tpu.dot_dimension_numbers<[1], [0], [0], [1], [0, 0, 1, 1], [], []>} : vector<32x4xbf16>, vector<4x16xbf16>, vector<32x16xf32> -> vector<32x16xf32>
    %6 = vector.broadcast %4 : vector<32x1xf32> to vector<32x16xf32>
    %7 = arith.addf %5, %6 : vector<32x16xf32>
    %cst_6 = arith.constant 0.000000e+00 : f32
    %8 = vector.broadcast %cst_6 : f32 to vector<32x16xf32>
    %9 = arith.maximumf %7, %8 : vector<32x16xf32>
    %10 = arith.truncf %9 : vector<32x16xf32> to vector<32x16xbf16>
    %c0_7 = arith.constant 0 : index
    %c0_8 = arith.constant 0 : index
    %11 = vector.load %arg5[%c0_7, %c0_8] : memref<64x32xbf16, #tpu.memory_space<vmem>>, vector<64x32xbf16>
    %c0_9 = arith.constant 0 : index
    %c0_10 = arith.constant 0 : index
    %12 = vector.load %arg6[%c0_9, %c0_10] : memref<64x1xf32, #tpu.memory_space<vmem>>, vector<64x1xf32>
    %cst_11 = arith.constant dense<0.000000e+00> : vector<64x16xf32>
    %13 = tpu.matmul %11, %10, %cst_11 {dimension_numbers = #tpu.dot_dimension_numbers<[1], [0], [0], [1], [0, 0, 1, 1], [], []>} : vector<64x32xbf16>, vector<32x16xbf16>, vector<64x16xf32> -> vector<64x16xf32>
    %14 = vector.broadcast %12 : vector<64x1xf32> to vector<64x16xf32>
    %15 = arith.addf %13, %14 : vector<64x16xf32>
    %cst_12 = arith.constant 0.000000e+00 : f32
    %16 = vector.broadcast %cst_12 : f32 to vector<64x16xf32>
    %17 = arith.maximumf %15, %16 : vector<64x16xf32>
    %18 = arith.truncf %17 : vector<64x16xf32> to vector<64x16xbf16>
    %c0_13 = arith.constant 0 : index
    %c0_14 = arith.constant 0 : index
    %19 = vector.load %arg7[%c0_13, %c0_14] : memref<16x64xbf16, #tpu.memory_space<vmem>>, vector<16x64xbf16>
    %c0_15 = arith.constant 0 : index
    %c0_16 = arith.constant 0 : index
    %20 = vector.load %arg8[%c0_15, %c0_16] : memref<16x1xf32, #tpu.memory_space<vmem>>, vector<16x1xf32>
    %cst_17 = arith.constant dense<0.000000e+00> : vector<16x16xf32>
    %21 = tpu.matmul %19, %18, %cst_17 {dimension_numbers = #tpu.dot_dimension_numbers<[1], [0], [0], [1], [0, 0, 1, 1], [], []>} : vector<16x64xbf16>, vector<64x16xbf16>, vector<16x16xf32> -> vector<16x16xf32>
    %22 = vector.broadcast %20 : vector<16x1xf32> to vector<16x16xf32>
    %23 = arith.addf %21, %22 : vector<16x16xf32>
    %c0_18 = arith.constant 0 : index
    %c0_19 = arith.constant 0 : index
    %c0_20 = arith.constant 0 : index
    %24 = vector.load %arg9[%c0_18, %c0_19, %c0_20] : memref<1x16x16xf32, #tpu.memory_space<vmem>>, vector<1x16x16xf32>
    %25 = vector.shape_cast %24 : vector<1x16x16xf32> to vector<16x16xf32>
    %26 = vector.shape_cast %23 : vector<16x16xf32> to vector<1x16x16xf32>
    tpu.vector_store %arg9[%c0_18, %c0_19, %c0_20], %26 {strides = array<i32>} : memref<1x16x16xf32, #tpu.memory_space<vmem>>, vector<1x16x16xf32>,
    return
  }
  func.func @transform_0(%arg0: i32, %arg1: i32) -> (i32, i32, i32) {
    %c0_i32 = arith.constant 0 : i32
    %c0_i32_0 = arith.constant 0 : i32
    return %arg0, %c0_i32, %arg1 : i32, i32, i32
  }
  func.func @transform_1(%arg0: i32, %arg1: i32) -> (i32, i32) {
    %c0_i32 = arith.constant 0 : i32
    %c0_i32_0 = arith.constant 0 : i32
    %c0_i32_1 = arith.constant 0 : i32
    return %c0_i32, %c0_i32_0 : i32, i32
  }
  func.func @transform_2(%arg0: i32, %arg1: i32) -> (i32, i32) {
    %c0_i32 = arith.constant 0 : i32
    %c0_i32_0 = arith.constant 0 : i32
    %c0_i32_1 = arith.constant 0 : i32
    return %c0_i32, %c0_i32_0 : i32, i32
  }
  func.func @transform_3(%arg0: i32, %arg1: i32) -> (i32, i32) {
    %c0_i32 = arith.constant 0 : i32
    %c0_i32_0 = arith.constant 0 : i32
    %c0_i32_1 = arith.constant 0 : i32
    return %c0_i32, %c0_i32_0 : i32, i32
  }
  func.func @transform_4(%arg0: i32, %arg1: i32) -> (i32, i32) {
    %c0_i32 = arith.constant 0 : i32
    %c0_i32_0 = arith.constant 0 : i32
    %c0_i32_1 = arith.constant 0 : i32
    return %c0_i32, %c0_i32_0 : i32, i32
  }
  func.func @transform_5(%arg0: i32, %arg1: i32) -> (i32, i32) {
    %c0_i32 = arith.constant 0 : i32
    %c0_i32_0 = arith.constant 0 : i32
    %c0_i32_1 = arith.constant 0 : i32
    return %c0_i32, %c0_i32_0 : i32, i32
  }
  func.func @transform_6(%arg0: i32, %arg1: i32) -> (i32, i32) {
    %c0_i32 = arith.constant 0 : i32
    %c0_i32_0 = arith.constant 0 : i32
    %c0_i32_1 = arith.constant 0 : i32
    return %c0_i32, %c0_i32_0 : i32, i32
  }
  func.func @transform_7(%arg0: i32, %arg1: i32) -> (i32, i32, i32) {
    %c0_i32 = arith.constant 0 : i32
    %c0_i32_0 = arith.constant 0 : i32
    return %arg0, %c0_i32, %arg1 : i32, i32, i32
  }
}

</mosaic_0001>

<llo_original>
// kernel: tpu_custom_call.1
$region0: #{tpu_custom_call.1}
  #allocation0 [shape = 'u32[]', space=smem, size = 0x4, offset = 0x4, fixed_abs, tag = 'smem constant byte address 0x4 - core index']
  #allocation1 [shape = 'u32[144,128]{1,0:T(1,128)}', space=vmem, size = 0x12000, scoped, tag = 'internal scratch']
  %s0 = inlined_call_operand.vmem [shape: f32[2,4,16], index: 0, kind: input, shape index: {}]
  %s1 = inlined_call_operand.vmem [shape: bf16[32,4], index: 1, kind: input, shape index: {}]
  %s2 = inlined_call_operand.vmem [shape: f32[32,1], index: 2, kind: input, shape index: {}]
  %s3 = inlined_call_operand.vmem [shape: bf16[64,32], index: 3, kind: input, shape index: {}]
  %s4 = inlined_call_operand.vmem [shape: f32[64,1], index: 4, kind: input, shape index: {}]
  %s5 = inlined_call_operand.vmem [shape: bf16[16,64], index: 5, kind: input, shape index: {}]
  %s6 = inlined_call_operand.vmem [shape: f32[16,1], index: 6, kind: input, shape index: {}]
  %s7 = inlined_call_operand.hbm [shape: f32[2,16,16], index: 7, kind: output, shape index: {}]
  %s8 = sld [smem:[#allocation0]]
  $region61: #{tpu_custom_call.1} parent=0
    _
  %s10 = ssub.s32 1, %s8
  %s11 = scalar_select 0, %s10, %s8
  $region1: #{tpu_custom_call.1} parent=0
    #allocation2 [shape = 'u8[16384]{0}', space=vmem, size = 0x4000, scoped, tag = 'output window, operand 0']
    #allocation3 [shape = 's32[2]{0}', space=sflag, size = 0x8, scoped, tag = 'scoped memory for tpu_custom_call.1']
    %12 = vsyncpa [#allocation3], 0
    %s13 = scalar_lea.sflag [#allocation3], 1
    %14 = vsyncpa %s13, 0
    loop: start=0, step=1, limit=4
    $region2: #{tpu_custom_call.1} parent=1 // loop_pre_header
      _
    $region3: #{tpu_custom_call.1} parent=1 // loop_header
      %s16 = sphi 0, %s20
      %p17 = scmp.ge.s32.totalorder %s16, 4
      %s23 = sphi 0, %s35
      %s24 = sphi 0, %s31
      %s25 = sphi 0, %s23
      %s26 = sphi 0, %s24
      %s27 = sphi 0, %s25
      %s28 = sphi 0, %s26
      %s40 = sphi 0, %s42
      %s43 = sphi 0, %s40
      %s44 = sphi 0, %s43
      %s60 = sphi 0, %s44
      %s64 = sphi 0, %s64
      %s66 = sphi 0, %s64
      %s67 = sphi 0, %s66
      %s81 = sphi 0, %s67
      %s85 = sphi 0, %s85
      %s87 = sphi 0, %s85
      %s88 = sphi 0, %s87
      %s102 = sphi 0, %s88
      %s106 = sphi 0, %s106
      %s108 = sphi 0, %s106
      %s109 = sphi 0, %s108
      %s123 = sphi 0, %s109
      %s127 = sphi 0, %s127
      %s129 = sphi 0, %s127
      %s130 = sphi 0, %s129
      %s144 = sphi 0, %s130
      %s148 = sphi 0, %s148
      %s150 = sphi 0, %s148
      %s151 = sphi 0, %s150
      %s165 = sphi 0, %s151
      %s169 = sphi 0, %s169
      %s171 = sphi 0, %s169
      %s172 = sphi 0, %s171
      %s186 = sphi 0, %s172
      %s194 = sphi 0, %s196
      %s197 = sphi 0, %s194
      %s198 = sphi 0, %s197
      %s214 = sphi 0, %s198
    $region4: #{tpu_custom_call.1} parent=1 // loop_header_branch
      %19 = sbr.rel (%p17) target = $region8
    $region5: #{tpu_custom_call.1} parent=1 // loop_body
      %s21 = ssub.s32 %s16, 1
      %s22 = ssub.s32 %s16, 2
      %s29 = sadd.s32 1, %s24
      %p30 = scmp.ge.s32.totalorder %s29, 1
      %s31 = scalar_select %p30, 0, %s29
      %s32 = sadd.s32 1, %s23
      %s33 = scalar_select %p30, %s32, %s23
      %p34 = scmp.ge.s32.totalorder %s33, 2
      %s35 = scalar_select %p34, 0, %s33
      %s36 = ssub.s32 %s23, %s35
      %s37 = ssub.s32 %s24, %s31
      %s38 = sor.u32 %s36, %s37
      %p39 = scmp.eq.s32.totalorder %s38, 0
      %s41 = sadd.s32 %s40, 1
      %s42 = scalar_select %p39, %s40, %s41
      %p45 = pneg %p39
      %p46 = scmp.eq.s32.totalorder %s16, 1
      %p47 = por %p45, %p46
      %p48 = scmp.ne.s32.totalorder %s40, %s43
      %p49 = scmp.eq.s32.totalorder %s16, 0
      %p50 = por %p48, %p49
      %p51 = scmp.ne.s32.totalorder %s40, %s43
      %p52 = scmp.eq.s32.totalorder %s21, 1
      %p53 = por %p51, %p52
      %p54 = scmp.ne.s32.totalorder %s43, %s44
      %p55 = scmp.eq.s32.totalorder %s21, 0
      %p56 = por %p54, %p55
      %p57 = scmp.ne.s32.totalorder %s43, %s44
      %p58 = scmp.eq.s32.totalorder %s22, 1
      %p59 = por %p57, %p58
      %p61 = scmp.ne.s32.totalorder %s44, %s60
      %p62 = scmp.eq.s32.totalorder %s22, 0
      %p63 = por %p61, %p62
      %s65 = sadd.s32 %s64, 1
      %p68 = scmp.eq.s32.totalorder %s16, 1
      %p69 = scmp.ne.s32.totalorder %s64, %s66
      %p70 = scmp.eq.s32.totalorder %s16, 0
      %p71 = por %p69, %p70
      %p72 = scmp.ne.s32.totalorder %s64, %s66
      %p73 = scmp.eq.s32.totalorder %s21, 1
      %p74 = por %p72, %p73
      %p75 = scmp.ne.s32.totalorder %s66, %s67
      %p76 = scmp.eq.s32.totalorder %s21, 0
      %p77 = por %p75, %p76
      %p78 = scmp.ne.s32.totalorder %s66, %s67
      %p79 = scmp.eq.s32.totalorder %s22, 1
      %p80 = por %p78, %p79
      %p82 = scmp.ne.s32.totalorder %s67, %s81
      %p83 = scmp.eq.s32.totalorder %s22, 0
      %p84 = por %p82, %p83
      %s86 = sadd.s32 %s85, 1
      %p89 = scmp.eq.s32.totalorder %s16, 1
      %p90 = scmp.ne.s32.totalorder %s85, %s87
      %p91 = scmp.eq.s32.totalorder %s16, 0
      %p92 = por %p90, %p91
      %p93 = scmp.ne.s32.totalorder %s85, %s87
      %p94 = scmp.eq.s32.totalorder %s21, 1
      %p95 = por %p93, %p94
      %p96 = scmp.ne.s32.totalorder %s87, %s88
      %p97 = scmp.eq.s32.totalorder %s21, 0
      %p98 = por %p96, %p97
      %p99 = scmp.ne.s32.totalorder %s87, %s88
      %p100 = scmp.eq.s32.totalorder %s22, 1
      %p101 = por %p99, %p100
      %p103 = scmp.ne.s32.totalorder %s88, %s102
      %p104 = scmp.eq.s32.totalorder %s22, 0
      %p105 = por %p103, %p104
      %s107 = sadd.s32 %s106, 1
      %p110 = scmp.eq.s32.totalorder %s16, 1
      %p111 = scmp.ne.s32.totalorder %s106, %s108
      %p112 = scmp.eq.s32.totalorder %s16, 0
      %p113 = por %p111, %p112
      %p114 = scmp.ne.s32.totalorder %s106, %s108
      %p115 = scmp.eq.s32.totalorder %s21, 1
      %p116 = por %p114, %p115
      %p117 = scmp.ne.s32.totalorder %s108, %s109
      %p118 = scmp.eq.s32.totalorder %s21, 0
      %p119 = por %p117, %p118
      %p120 = scmp.ne.s32.totalorder %s108, %s109
      %p121 = scmp.eq.s32.totalorder %s22, 1
      %p122 = por %p120, %p121
      %p124 = scmp.ne.s32.totalorder %s109, %s123
      %p125 = scmp.eq.s32.totalorder %s22, 0
      %p126 = por %p124, %p125
      %s128 = sadd.s32 %s127, 1
      %p131 = scmp.eq.s32.totalorder %s16, 1
      %p132 = scmp.ne.s32.totalorder %s127, %s129
      %p133 = scmp.eq.s32.totalorder %s16, 0
      %p134 = por %p132, %p133
      %p135 = scmp.ne.s32.totalorder %s127, %s129
      %p136 = scmp.eq.s32.totalorder %s21, 1
      %p137 = por %p135, %p136
      %p138 = scmp.ne.s32.totalorder %s129, %s130
      %p139 = scmp.eq.s32.totalorder %s21, 0
      %p140 = por %p138, %p139
      %p141 = scmp.ne.s32.totalorder %s129, %s130
      %p142 = scmp.eq.s32.totalorder %s22, 1
      %p143 = por %p141, %p142
      %p145 = scmp.ne.s32.totalorder %s130, %s144
      %p146 = scmp.eq.s32.totalorder %s22, 0
      %p147 = por %p145, %p146
      %s149 = sadd.s32 %s148, 1
      %p152 = scmp.eq.s32.totalorder %s16, 1
      %p153 = scmp.ne.s32.totalorder %s148, %s150
      %p154 = scmp.eq.s32.totalorder %s16, 0
      %p155 = por %p153, %p154
      %p156 = scmp.ne.s32.totalorder %s148, %s150
      %p157 = scmp.eq.s32.totalorder %s21, 1
      %p158 = por %p156, %p157
      %p159 = scmp.ne.s32.totalorder %s150, %s151
      %p160 = scmp.eq.s32.totalorder %s21, 0
      %p161 = por %p159, %p160
      %p162 = scmp.ne.s32.totalorder %s150, %s151
      %p163 = scmp.eq.s32.totalorder %s22, 1
      %p164 = por %p162, %p163
      %p166 = scmp.ne.s32.totalorder %s151, %s165
      %p167 = scmp.eq.s32.totalorder %s22, 0
      %p168 = por %p166, %p167
      %s170 = sadd.s32 %s169, 1
      %p173 = scmp.eq.s32.totalorder %s16, 1
      %p174 = scmp.ne.s32.totalorder %s169, %s171
      %p175 = scmp.eq.s32.totalorder %s16, 0
      %p176 = por %p174, %p175
      %p177 = scmp.ne.s32.totalorder %s169, %s171
      %p178 = scmp.eq.s32.totalorder %s21, 1
      %p179 = por %p177, %p178
      %p180 = scmp.ne.s32.totalorder %s171, %s172
      %p181 = scmp.eq.s32.totalorder %s21, 0
      %p182 = por %p180, %p181
      %p183 = scmp.ne.s32.totalorder %s171, %s172
      %p184 = scmp.eq.s32.totalorder %s22, 1
      %p185 = por %p183, %p184
      %p187 = scmp.ne.s32.totalorder %s172, %s186
      %p188 = scmp.eq.s32.totalorder %s22, 0
      %p189 = por %p187, %p188
      %s190 = ssub.s32 %s23, %s35
      %s191 = ssub.s32 %s24, %s31
      %s192 = sor.u32 %s190, %s191
      %p193 = scmp.eq.s32.totalorder %s192, 0
      %s195 = sadd.s32 %s194, 1
      %s196 = scalar_select %p193, %s194, %s195
      %p199 = pneg %p193
      %p200 = scmp.eq.s32.totalorder %s16, 1
      %p201 = por %p199, %p200
      %p202 = scmp.ne.s32.totalorder %s194, %s197
      %p203 = scmp.eq.s32.totalorder %s16, 0
      %p204 = por %p202, %p203
      %p205 = scmp.ne.s32.totalorder %s194, %s197
      %p206 = scmp.eq.s32.totalorder %s21, 1
      %p207 = por %p205, %p206
      %p208 = scmp.ne.s32.totalorder %s197, %s198
      %p209 = scmp.eq.s32.totalorder %s21, 0
      %p210 = por %p208, %p209
      %p211 = scmp.ne.s32.totalorder %s197, %s198
      %p212 = scmp.eq.s32.totalorder %s22, 1
      %p213 = por %p211, %p212
      %p215 = scmp.ne.s32.totalorder %s198, %s214
      %p216 = scmp.eq.s32.totalorder %s22, 0
      %p217 = por %p215, %p216
      %p218 = scmp.le.s32.totalorder 1, %s16
      %p219 = scmp.lt.s32.totalorder %s16, 3
      %p220 = pnand %p218, %p219
      %p221 = pneg %p220
      // Predicated region
      $region9: #{tpu_custom_call.1} parent=5 // pred_check
        _
      $region10: #{tpu_custom_call.1} parent=5 // pred_check_branch
        %223 = sbr.rel (%p220) target = $region12
      $region11: #{tpu_custom_call.1} parent=5 // pred_region
        %s224 = ssub.s32 %s16, 1
        // Predicated region
        $region13: #{tpu_custom_call.1} parent=11 // pred_check
          %p225 = pneg %p77
        $region14: #{tpu_custom_call.1} parent=11 // pred_check_branch
          %227 = sbr.rel (%p225) target = $region16
        $region15: #{tpu_custom_call.1} parent=11 // pred_region
          _
        $region16: #{tpu_custom_call.1} parent=11 // pred_fallthru
          _
        // Predicated region
        $region17: #{tpu_custom_call.1} parent=11 // pred_check
          %p228 = pneg %p98
        $region18: #{tpu_custom_call.1} parent=11 // pred_check_branch
          %230 = sbr.rel (%p228) target = $region20
        $region19: #{tpu_custom_call.1} parent=11 // pred_region
          _
        $region20: #{tpu_custom_call.1} parent=11 // pred_fallthru
          _
        // Predicated region
        $region21: #{tpu_custom_call.1} parent=11 // pred_check
          %p231 = pneg %p119
        $region22: #{tpu_custom_call.1} parent=11 // pred_check_branch
          %233 = sbr.rel (%p231) target = $region24
        $region23: #{tpu_custom_call.1} parent=11 // pred_region
          _
        $region24: #{tpu_custom_call.1} parent=11 // pred_fallthru
          _
        // Predicated region
        $region25: #{tpu_custom_call.1} parent=11 // pred_check
          %p234 = pneg %p140
        $region26: #{tpu_custom_call.1} parent=11 // pred_check_branch
          %236 = sbr.rel (%p234) target = $region28
        $region27: #{tpu_custom_call.1} parent=11 // pred_region
          _
        $region28: #{tpu_custom_call.1} parent=11 // pred_fallthru
          _
        // Predicated region
        $region29: #{tpu_custom_call.1} parent=11 // pred_check
          %p237 = pneg %p161
        $region30: #{tpu_custom_call.1} parent=11 // pred_check_branch
          %239 = sbr.rel (%p237) target = $region32
        $region31: #{tpu_custom_call.1} parent=11 // pred_region
          _
        $region32: #{tpu_custom_call.1} parent=11 // pred_fallthru
          _
        // Predicated region
        $region33: #{tpu_custom_call.1} parent=11 // pred_check
          %p240 = pneg %p182
        $region34: #{tpu_custom_call.1} parent=11 // pred_check_branch
          %242 = sbr.rel (%p240) target = $region36
        $region35: #{tpu_custom_call.1} parent=11 // pred_region
          _
        $region36: #{tpu_custom_call.1} parent=11 // pred_fallthru
          _
      $region12: #{tpu_custom_call.1} parent=5 // pred_fallthru
        _
      %p243 = scmp.lt.s32.totalorder %s16, 2
      // Predicated region
      $region37: #{tpu_custom_call.1} parent=5 // pred_check
        %p244 = pneg %p243
      $region38: #{tpu_custom_call.1} parent=5 // pred_check_branch
        %246 = sbr.rel (%p244) target = $region40
      $region39: #{tpu_custom_call.1} parent=5 // pred_region
        // Predicated region
        $region41: #{tpu_custom_call.1} parent=39 // pred_check
          %p247 = pneg %p50
        $region42: #{tpu_custom_call.1} parent=39 // pred_check_branch
          %249 = sbr.rel (%p247) target = $region44
        $region43: #{tpu_custom_call.1} parent=39 // pred_region
          %p250 = scmp.lt.s32.totalorder %s23, 1
          %s251 = scalar_select %p250, %s23, 1
          %p252 = scmp.lt.s32.totalorder %s24, 0
          %s253 = scalar_select %p252, %s24, 0
          %s254 = sadd.s32 %s253, %s251
          %s255 = smul.addr %s254, 4
          %s256 = scalar_lea.vmem %s0, %s255
        $region44: #{tpu_custom_call.1} parent=39 // pred_fallthru
          _
      $region40: #{tpu_custom_call.1} parent=5 // pred_fallthru
        _
      %p257 = scmp.le.s32.totalorder 1, %s16
      %p258 = scmp.lt.s32.totalorder %s16, 3
      %p259 = pnand %p257, %p258
      %p260 = pneg %p259
      // Predicated region
      $region45: #{tpu_custom_call.1} parent=5 // pred_check
        _
      $region46: #{tpu_custom_call.1} parent=5 // pred_check_branch
        %262 = sbr.rel (%p259) target = $region48
      $region47: #{tpu_custom_call.1} parent=5 // pred_region
        %s263 = ssub.s32 %s16, 1
        %p264 = scmp.lt.s32.totalorder %s25, 1
        %s265 = scalar_select %p264, %s25, 1
        %p266 = scmp.lt.s32.totalorder %s26, 0
        %s267 = scalar_select %p266, %s26, 0
        %s268 = sadd.s32 %s267, %s265
        %s269 = smul.addr %s268, 4
        %s270 = scalar_lea.vmem %s0, %s269
        %p271 = pneg %p56
        %p272 = pneg %p53
        %p273 = pneg %p77
        %p274 = pneg %p74
        %p275 = pneg %p98
        %p276 = pneg %p95
        %p277 = pneg %p119
        %p278 = pneg %p116
        %p279 = pneg %p140
        %p280 = pneg %p137
        %p281 = pneg %p161
        %p282 = pneg %p158
        %p283 = pneg %p182
        %p284 = pneg %p179
        %p285 = pneg %p210
        %p286 = pneg %p207
        %s287 = sand.u32 %s197, 1
        %s288 = scalar_lea.sflag [#allocation3], %s287
        %s289 = sand.u32 %s197, 1
        %s290 = smul.addr %s289, 16
        %s291 = scalar_lea.vmem [#allocation2], %s290
        %p292 = scmp.lt.s32.totalorder %s25, 1
        %s293 = scalar_select %p292, %s25, 1
        %p294 = scmp.lt.s32.totalorder %s26, 0
        %s295 = scalar_select %p294, %s26, 0
        %s296 = sadd.s32 %s295, %s293
        %s297 = smul.addr %s296, 4
        %s298 = scalar_lea.vmem %s0, %s297
        %v300 = vld [vmem:[%s298] sm:$0xf]
        %v301 = vpack.c.bf16 %v300, %v300
        %v302 = vld [vmem:[%s1] sm:$0xf]
        %v303 = vld [vmem:[%s1 + $0x4] sm:$0xf]
        %v304 = vld [vmem:[%s1 + $0x8] sm:$0xf]
        %v305 = vld [vmem:[%s1 + $0xc] sm:$0xf]
        %v306 = vld [vmem:[%s2] sm:$0xff]
        %v307 = vld [vmem:[%s2 + $0x8] sm:$0xff]
        %v308 = vld [vmem:[%s2 + $0x10] sm:$0xff]
        %v309 = vld [vmem:[%s2 + $0x18] sm:$0xff]
        %311 = vset.pattern.permute.xlu0 0
        %312 = vperm.xlu0 %311, %v306
        %v313 = vpop.permute.xlu0 %312
        %316 = vset.pattern.permute.xlu0 0
        %317 = vperm.xlu0 %316, %v307
        %v318 = vpop.permute.xlu0 %317
        %321 = vset.pattern.permute.xlu0 0
        %322 = vperm.xlu0 %321, %v308
        %v323 = vpop.permute.xlu0 %322
        %326 = vset.pattern.permute.xlu0 0
        %327 = vperm.xlu0 %326, %v309
        %v328 = vpop.permute.xlu0 %327
        %v334 = vunpack.c.l.b16 %v302
        %v335 = vunpack.c.l.b16 %v303
        %v336 = vunpack.c.l.b16 %v304
        %v337 = vunpack.c.l.b16 %v305
        %v338 = vpack.c.b16 %v335, %v334
        %v339 = vpack.c.b16 %v337, %v336
        %vm340 = vcmask 31744
        %v342 = vsel %vm340, %v338, 0
        %v345 = vsel %vm340, %v339, 0
        %vm347 = vcmask 1041408
        %v349 = vsel %vm347, %v301, 0
        %351 = vmatprep.subr.bf16.mxu0 0
        %352 = vmatpush1.bf16.msra.mxu0 %v349
        %353 = vmatprep.subr.bf16.mxu0 0
        %354 = vmatpush1.bf16.msra.mxu0 0
        %355 = vmatprep.subr.bf16.mxu0 0
        %356 = vmatpush1.bf16.msra.mxu0 0
        %357 = vmatprep.subr.bf16.mxu0 0
        %358 = vmatpush1.bf16.msra.mxu0 0
        %359 = vmatprep.subr.bf16.mxu0 0
        %360 = vmatpush1.bf16.msra.mxu0 0
        %361 = vmatprep.subr.bf16.mxu0 0
        %362 = vmatpush1.bf16.msra.mxu0 0
        %363 = vmatprep.subr.bf16.mxu0 0
        %364 = vmatpush1.bf16.msra.mxu0 0
        %365 = vmatprep.subr.bf16.mxu0 0
        %366 = vmatpush1.bf16.msra.mxu0 0
        %367 = vmatprep.subr.bf16.mxu0 0
        %368 = vmatpush1.bf16.msra.mxu0 0
        %369 = vmatprep.subr.bf16.mxu0 0
        %370 = vmatpush1.bf16.msra.mxu0 0
        %371 = vmatprep.subr.bf16.mxu0 0
        %372 = vmatpush1.bf16.msra.mxu0 0
        %373 = vmatprep.subr.bf16.mxu0 0
        %374 = vmatpush1.bf16.msra.mxu0 0
        %375 = vmatprep.subr.bf16.mxu0 0
        %376 = vmatpush1.bf16.msra.mxu0 0
        %377 = vmatprep.subr.bf16.mxu0 0
        %378 = vmatpush1.bf16.msra.mxu0 0
        %379 = vmatprep.subr.bf16.mxu0 0
        %380 = vmatpush1.bf16.msra.mxu0 0
        %381 = vmatprep.subr.bf16.mxu0 0
        %382 = vmatpush1.bf16.msra.mxu0 0
        %383 = vmatprep.mubr.bf16.mxu0 0
        %384 = vmatmul.mubr.bf16.gmra.mrb[0].mxu0 %v342
        %v385 = vpop.f32.mrb[0].mxu0
        %v386 = vadd.f32 %v313, %v385
        %v387 = vpop.f32.mrb[0].mxu0
        %v388 = vpop.f32.mrb[0].mxu0
        %v389 = vadd.f32 %v318, %v388
        %v390 = vpop.f32.mrb[0].mxu0
        %391 = vmatprep.mubr.bf16.mxu0 0
        %392 = vmatmul.mubr.bf16.gmra.mrb[0].mxu0 %v345
        %v393 = vpop.f32.mrb[0].mxu0
        %v394 = vadd.f32 %v323, %v393
        %v395 = vpop.f32.mrb[0].mxu0
        %v396 = vpop.f32.mrb[0].mxu0
        %v397 = vadd.f32 %v328, %v396
        %v398 = vpop.f32.mrb[0].mxu0
        %399 = vdwg.mxu0
        %v400 = vmax.f32 %v386, 0.0
        %v401 = vmax.f32 %v389, 0.0
        %v402 = vmax.f32 %v394, 0.0
        %v403 = vmax.f32 %v397, 0.0
        %v404 = vpack.c.bf16 %v401, %v400
        %v405 = vpack.c.bf16 %v403, %v402
        %v406 = vld [vmem:[%s3] sm:$0xf]
        %v407 = vld [vmem:[%s3 + $0x4] sm:$0xf]
        %v408 = vld [vmem:[%s3 + $0x8] sm:$0xf]
        %v409 = vld [vmem:[%s3 + $0xc] sm:$0xf]
        %v410 = vld [vmem:[%s3 + $0x10] sm:$0xf]
        %v411 = vld [vmem:[%s3 + $0x14] sm:$0xf]
        %v412 = vld [vmem:[%s3 + $0x18] sm:$0xf]
        %v413 = vld [vmem:[%s3 + $0x1c] sm:$0xf]
        %v414 = vld [vmem:[%s4] sm:$0xff]
        %v415 = vld [vmem:[%s4 + $0x8] sm:$0xff]
        %v416 = vld [vmem:[%s4 + $0x10] sm:$0xff]
        %v417 = vld [vmem:[%s4 + $0x18] sm:$0xff]
        %v418 = vld [vmem:[%s4 + $0x20] sm:$0xff]
        %v419 = vld [vmem:[%s4 + $0x28] sm:$0xff]
        %v420 = vld [vmem:[%s4 + $0x30] sm:$0xff]
        %v421 = vld [vmem:[%s4 + $0x38] sm:$0xff]
        %423 = vset.pattern.permute.xlu0 0
        %424 = vperm.xlu0 %423, %v414
        %v425 = vpop.permute.xlu0 %424
        %428 = vset.pattern.permute.xlu0 0
        %429 = vperm.xlu0 %428, %v415
        %v430 = vpop.permute.xlu0 %429
        %433 = vset.pattern.permute.xlu0 0
        %434 = vperm.xlu0 %433, %v416
        %v435 = vpop.permute.xlu0 %434
        %438 = vset.pattern.permute.xlu0 0
        %439 = vperm.xlu0 %438, %v417
        %v440 = vpop.permute.xlu0 %439
        %443 = vset.pattern.permute.xlu0 0
        %444 = vperm.xlu0 %443, %v418
        %v445 = vpop.permute.xlu0 %444
        %448 = vset.pattern.permute.xlu0 0
        %449 = vperm.xlu0 %448, %v419
        %v450 = vpop.permute.xlu0 %449
        %453 = vset.pattern.permute.xlu0 0
        %454 = vperm.xlu0 %453, %v420
        %v455 = vpop.permute.xlu0 %454
        %458 = vset.pattern.permute.xlu0 0
        %459 = vperm.xlu0 %458, %v421
        %v460 = vpop.permute.xlu0 %459
        %v470 = vunpack.c.l.b16 %v406
        %v471 = vunpack.c.l.b16 %v407
        %v472 = vunpack.c.l.b16 %v408
        %v473 = vunpack.c.l.b16 %v409
        %v474 = vunpack.c.l.b16 %v410
        %v475 = vunpack.c.l.b16 %v411
        %v476 = vunpack.c.l.b16 %v412
        %v477 = vunpack.c.l.b16 %v413
        %v478 = vpack.c.b16 %v471, %v470
        %v479 = vpack.c.b16 %v473, %v472
        %v480 = vpack.c.b16 %v475, %v474
        %v481 = vpack.c.b16 %v477, %v476
        %vm482 = vcmask 261120
        %v484 = vsel %vm482, %v478, 0
        %v487 = vsel %vm482, %v479, 0
        %v490 = vsel %vm482, %v480, 0
        %v493 = vsel %vm482, %v481, 0
        %495 = vmatprep.subr.bf16.mxu0 0
        %496 = vmatpush1.bf16.msra.mxu0 %v404
        %497 = vmatprep.subr.bf16.mxu0 0
        %498 = vmatpush1.bf16.msra.mxu0 %v405
        %499 = vmatprep.subr.bf16.mxu0 0
        %500 = vmatpush1.bf16.msra.mxu0 0
        %501 = vmatprep.subr.bf16.mxu0 0
        %502 = vmatpush1.bf16.msra.mxu0 0
        %503 = vmatprep.subr.bf16.mxu0 0
        %504 = vmatpush1.bf16.msra.mxu0 0
        %505 = vmatprep.subr.bf16.mxu0 0
        %506 = vmatpush1.bf16.msra.mxu0 0
        %507 = vmatprep.subr.bf16.mxu0 0
        %508 = vmatpush1.bf16.msra.mxu0 0
        %509 = vmatprep.subr.bf16.mxu0 0
        %510 = vmatpush1.bf16.msra.mxu0 0
        %511 = vmatprep.subr.bf16.mxu0 0
        %512 = vmatpush1.bf16.msra.mxu0 0
        %513 = vmatprep.subr.bf16.mxu0 0
        %514 = vmatpush1.bf16.msra.mxu0 0
        %515 = vmatprep.subr.bf16.mxu0 0
        %516 = vmatpush1.bf16.msra.mxu0 0
        %517 = vmatprep.subr.bf16.mxu0 0
        %518 = vmatpush1.bf16.msra.mxu0 0
        %519 = vmatprep.subr.bf16.mxu0 0
        %520 = vmatpush1.bf16.msra.mxu0 0
        %521 = vmatprep.subr.bf16.mxu0 0
        %522 = vmatpush1.bf16.msra.mxu0 0
        %523 = vmatprep.subr.bf16.mxu0 0
        %524 = vmatpush1.bf16.msra.mxu0 0
        %525 = vmatprep.subr.bf16.mxu0 0
        %526 = vmatpush1.bf16.msra.mxu0 0
        %527 = vmatprep.mubr.bf16.mxu0 0
        %528 = vmatmul.mubr.bf16.gmra.mrb[0].mxu0 %v484
        %v529 = vpop.f32.mrb[0].mxu0
        %v530 = vadd.f32 %v425, %v529
        %v531 = vpop.f32.mrb[0].mxu0
        %v532 = vpop.f32.mrb[0].mxu0
        %v533 = vadd.f32 %v430, %v532
        %v534 = vpop.f32.mrb[0].mxu0
        %535 = vmatprep.mubr.bf16.mxu0 0
        %536 = vmatmul.mubr.bf16.gmra.mrb[0].mxu0 %v487
        %v537 = vpop.f32.mrb[0].mxu0
        %v538 = vadd.f32 %v435, %v537
        %v539 = vpop.f32.mrb[0].mxu0
        %v540 = vpop.f32.mrb[0].mxu0
        %v541 = vadd.f32 %v440, %v540
        %v542 = vpop.f32.mrb[0].mxu0
        %543 = vmatprep.mubr.bf16.mxu0 0
        %544 = vmatmul.mubr.bf16.gmra.mrb[0].mxu0 %v490
        %v545 = vpop.f32.mrb[0].mxu0
        %v546 = vadd.f32 %v445, %v545
        %v547 = vpop.f32.mrb[0].mxu0
        %v548 = vpop.f32.mrb[0].mxu0
        %v549 = vadd.f32 %v450, %v548
        %v550 = vpop.f32.mrb[0].mxu0
        %551 = vmatprep.mubr.bf16.mxu0 0
        %552 = vmatmul.mubr.bf16.gmra.mrb[0].mxu0 %v493
        %v553 = vpop.f32.mrb[0].mxu0
        %v554 = vadd.f32 %v455, %v553
        %v555 = vpop.f32.mrb[0].mxu0
        %v556 = vpop.f32.mrb[0].mxu0
        %v557 = vadd.f32 %v460, %v556
        %v558 = vpop.f32.mrb[0].mxu0
        %559 = vdwg.mxu0
        %v560 = vmax.f32 %v530, 0.0
        %v561 = vmax.f32 %v533, 0.0
        %v562 = vmax.f32 %v538, 0.0
        %v563 = vmax.f32 %v541, 0.0
        %v564 = vmax.f32 %v546, 0.0
        %v565 = vmax.f32 %v549, 0.0
        %v566 = vmax.f32 %v554, 0.0
        %v567 = vmax.f32 %v557, 0.0
        %v568 = vpack.c.bf16 %v561, %v560
        %v569 = vpack.c.bf16 %v563, %v562
        %v570 = vpack.c.bf16 %v565, %v564
        %v571 = vpack.c.bf16 %v567, %v566
        %v572 = vld [vmem:[%s5] sm:$0xf]
        %v573 = vld [vmem:[%s5 + $0x4] sm:$0xf]
        %v574 = vld [vmem:[%s6] sm:$0xff]
        %v575 = vld [vmem:[%s6 + $0x8] sm:$0xff]
        %577 = vset.pattern.permute.xlu0 0
        %578 = vperm.xlu0 %577, %v574
        %v579 = vpop.permute.xlu0 %578
        %582 = vset.pattern.permute.xlu0 0
        %583 = vperm.xlu0 %582, %v575
        %v584 = vpop.permute.xlu0 %583
        %v588 = vunpack.c.l.b16 %v572
        %v589 = vunpack.c.l.b16 %v573
        %v590 = vpack.c.b16 %v589, %v588
        %vm591 = vcmask 523264
        %v593 = vsel %vm591, %v590, 0
        %595 = vmatprep.subr.bf16.mxu0 0
        %596 = vmatpush1.bf16.msra.mxu0 %v568
        %597 = vmatprep.subr.bf16.mxu0 0
        %598 = vmatpush1.bf16.msra.mxu0 %v569
        %599 = vmatprep.subr.bf16.mxu0 0
        %600 = vmatpush1.bf16.msra.mxu0 %v570
        %601 = vmatprep.subr.bf16.mxu0 0
        %602 = vmatpush1.bf16.msra.mxu0 %v571
        %603 = vmatprep.subr.bf16.mxu0 0
        %604 = vmatpush1.bf16.msra.mxu0 0
        %605 = vmatprep.subr.bf16.mxu0 0
        %606 = vmatpush1.bf16.msra.mxu0 0
        %607 = vmatprep.subr.bf16.mxu0 0
        %608 = vmatpush1.bf16.msra.mxu0 0
        %609 = vmatprep.subr.bf16.mxu0 0
        %610 = vmatpush1.bf16.msra.mxu0 0
        %611 = vmatprep.subr.bf16.mxu0 0
        %612 = vmatpush1.bf16.msra.mxu0 0
        %613 = vmatprep.subr.bf16.mxu0 0
        %614 = vmatpush1.bf16.msra.mxu0 0
        %615 = vmatprep.subr.bf16.mxu0 0
        %616 = vmatpush1.bf16.msra.mxu0 0
        %617 = vmatprep.subr.bf16.mxu0 0
        %618 = vmatpush1.bf16.msra.mxu0 0
        %619 = vmatprep.subr.bf16.mxu0 0
        %620 = vmatpush1.bf16.msra.mxu0 0
        %621 = vmatprep.subr.bf16.mxu0 0
        %622 = vmatpush1.bf16.msra.mxu0 0
        %623 = vmatprep.subr.bf16.mxu0 0
        %624 = vmatpush1.bf16.msra.mxu0 0
        %625 = vmatprep.subr.bf16.mxu0 0
        %626 = vmatpush1.bf16.msra.mxu0 0
        %627 = vmatprep.mubr.bf16.mxu0 0
        %628 = vmatmul.mubr.bf16.gmra.mrb[0].mxu0 %v593
        %v629 = vpop.f32.mrb[0].mxu0
        %v630 = vadd.f32 %v579, %v629
        %v631 = vpop.f32.mrb[0].mxu0
        %v632 = vpop.f32.mrb[0].mxu0
        %v633 = vadd.f32 %v584, %v632
        %v634 = vpop.f32.mrb[0].mxu0
        %635 = vdwg.mxu0
        %vm636 = vcmask 130048
        %637 = vst.msk [vmem:[%s291] sm:$0xff] %vm636, %v630
        %638 = vst.msk [vmem:[%s291 + $0x8] sm:$0xff] %vm636, %v633
        %s639 = sand.u32 %s197, 1
        %s640 = scalar_lea.sflag [#allocation3], %s639
        %s641 = sand.u32 %s197, 1
        %s642 = smul.addr %s641, 16
        %s643 = scalar_lea.vmem [#allocation2], %s642
        // Predicated region
        $region49: #{tpu_custom_call.1} parent=47 // pred_check
          %p644 = pneg %p207
        $region50: #{tpu_custom_call.1} parent=47 // pred_check_branch
          %646 = sbr.rel (%p644) target = $region52
        $region51: #{tpu_custom_call.1} parent=47 // pred_region
          %s648 = ssub.s32 256, 256
          %649 = vsyncadd %s640, %s648
          %s650 = smul.addr %s25, 2
          %s651 = sadd.s32 %s26, %s650
          %s652 = smul.addr %s651, 128
          %s653 = scalar_lea.hbm %s7, %s652
          %s654 = sshll.u32 %s643, 4
          %s655 = int_to_ptr.vmem [resolvable:$true] %s654
          %660 = dma.vmem_to_hbm [thread:$0]  %s655, 256, %s653, %s640, 128, 128, 8
        $region52: #{tpu_custom_call.1} parent=47 // pred_fallthru
          _
      $region48: #{tpu_custom_call.1} parent=5 // pred_fallthru
        _
      %p661 = scmp.le.s32.totalorder 2, %s16
      // Predicated region
      $region53: #{tpu_custom_call.1} parent=5 // pred_check
        %p662 = pneg %p661
      $region54: #{tpu_custom_call.1} parent=5 // pred_check_branch
        %664 = sbr.rel (%p662) target = $region56
      $region55: #{tpu_custom_call.1} parent=5 // pred_region
        %s665 = ssub.s32 %s16, 2
        // Predicated region
        $region57: #{tpu_custom_call.1} parent=55 // pred_check
          %p666 = pneg %p213
        $region58: #{tpu_custom_call.1} parent=55 // pred_check_branch
          %668 = sbr.rel (%p666) target = $region60
        $region59: #{tpu_custom_call.1} parent=55 // pred_region
          %s669 = sand.u32 %s198, 1
          %s670 = scalar_lea.sflag [#allocation3], %s669
          %s671 = sand.u32 %s198, 1
          %s672 = smul.addr %s671, 16
          %s673 = scalar_lea.vmem [#allocation2], %s672
          %674 = dma.done %s670, 256
        $region60: #{tpu_custom_call.1} parent=55 // pred_fallthru
          _
      $region56: #{tpu_custom_call.1} parent=5 // pred_fallthru
        _
    $region6: #{tpu_custom_call.1} parent=1 // loop_footer
      %s20 = sadd.s32 1, %s16
    $region7: #{tpu_custom_call.1} parent=1 // loop_footer_branch
      %15 = sbr.rel target = $region3
    $region8: #{tpu_custom_call.1} parent=1 // loop_exit
      _
    %675 = vsyncpa [#allocation3], 1
    %s676 = scalar_lea.sflag [#allocation3], 1
    %677 = vsyncpa %s676, 1

</llo_original>
